<compile_context>
chip_gen: v5e
topology: v5e:2x2
jax: 0.10.0
libtpu: 0.0.40
codegen_flags: <defaults>
</compile_context>

<pallas_src>
import jax
import jax.numpy as jnp
from jax import lax
from jax.experimental import pallas as pl
from jax.experimental.pallas import tpu as pltpu


# --------------------------------------------------------------------------- #
# Helpers
# --------------------------------------------------------------------------- #
def _round_up(x, m):
    return ((x + m - 1) // m) * m


def _divisors(n):
    out = set()
    i = 1
    while i * i <= n:
        if n % i == 0:
            out.add(i)
            out.add(n // i)
        i += 1
    return sorted(out, reverse=True)


def _tpu_kind():
    try:
        return jax.devices()[0].device_kind.lower()
    except Exception:
        return ""


def _chip_budget():
    """Returns (scoped-VMEM budget in bytes, chip has 2 TensorCores)."""
    kind = _tpu_kind()
    if "v7" in kind:
        # 64 MiB part: stay well below physical VMEM so Mosaic keeps headroom
        # for internal scratch / semaphores.
        return 48 * 1024 * 1024, True
    two_tc = ("v4" in kind) or ("v5p" in kind)
    # 128 MiB parts (v5e / v6e / v5p / v4): no artificial 64 MiB ceiling.
    return 96 * 1024 * 1024, two_tc


def _vmem_need(tm, K, Np, in_b, w_b, out_b):
    # double-buffered row tile + single-buffered weight/bias (Buffered(1)) +
    # double-buffered output tile + slack for Mosaic internals.
    return (2 * tm * K * in_b + K * Np * w_b + Np * 4
            + 2 * tm * Np * out_b + (1 << 20))


def _choose_row_tile(seq, batch, K, Np, in_b, w_b, out_b, budget, two_tc):
    """Pick a row tile (tm) and the padded row count.

    Prefers a divisor of `seq` (so no row padding is materialized), a multiple
    of 16 (bf16 sublane packing), as large as fits ~80% of the VMEM budget.
    On 2-TC chips with batch == 1 it forces >= 2 grid tiles so the parallel
    grid axis can shard across both TensorCores; single-TC chips keep the
    largest tile (a split would only add per-step overhead)."""
    fit = int(0.8 * budget)
    cands = [d for d in _divisors(seq)
             if _vmem_need(d, K, Np, in_b, w_b, out_b) <= fit]
    aligned = [d for d in cands if d % 8 == 0]
    if aligned:
        if two_tc and batch * (seq // max(aligned)) < 2 and seq >= 256:
            multi = [d for d in aligned if (seq // d) >= 2]
            if multi:
                aligned = multi
        tm = max(aligned, key=lambda d: (1 if d % 16 == 0 else 0, d))
        return tm, seq
    # Rare fallback (seq has no divisor that is a multiple of 8): pad rows.
    tm = min(512, _round_up(seq, 8))
    while tm > 8 and _vmem_need(tm, K, Np, in_b, w_b, out_b) > fit:
        tm = _round_up(max(8, tm // 2), 8)
    return tm, _round_up(seq, tm)


# --------------------------------------------------------------------------- #
# Pallas kernel: patches @ W + bias
# --------------------------------------------------------------------------- #
def _projection_kernel(x_ref, w_ref, b_ref, o_ref):
    # x_ref: (tm, K)  w_ref: (K, Np)  b_ref: (1, Np) f32  o_ref: (tm, Np)
    acc = jnp.dot(x_ref[...], w_ref[...], preferred_element_type=jnp.float32)
    o_ref[...] = (acc + b_ref[...]).astype(o_ref.dtype)


def videomae_patch_projection(patches, w_kn, bias_row, *, out_dtype, extra_rows=0):
    """patches: (B, seq, K); w_kn: (K, Np); bias_row: (1, Np) float32.

    Returns (B, rows_alloc, Np) in `out_dtype` where rows [0, seq) hold
    patches @ w_kn + bias and rows_alloc >= seq + extra_rows (tail rows are
    left for the caller to fill, e.g. with landmark tokens)."""
    B, seq, K = patches.shape
    Kw, Np = w_kn.shape
    assert K == Kw, (K, Kw)
    out_dtype = jnp.dtype(out_dtype)
    in_b, w_b, out_b = patches.dtype.itemsize, w_kn.dtype.itemsize, out_dtype.itemsize

    budget, two_tc = _chip_budget()
    tm, seq_pad = _choose_row_tile(seq, B, K, Np, in_b, w_b, out_b, budget, two_tc)
    if seq_pad != seq:
        # Rare fallback path only (seq has no 8-aligned divisor).
        patches = jnp.pad(patches, ((0, 0), (0, seq_pad - seq), (0, 0)))
    rows_alloc = max(seq_pad, seq + extra_rows)

    grid = (B, seq_pad // tm)
    flops = 2 * B * seq_pad * K * Np
    bytes_accessed = (B * seq_pad * K * in_b + K * Np * w_b + Np * 4
                      + B * seq_pad * Np * out_b)
    vmem_limit = int(min(budget, max(32 * 1024 * 1024,
                                     2 * _vmem_need(tm, K, Np, in_b, w_b, out_b))))

    return pl.pallas_call(
        _projection_kernel,
        out_shape=jax.ShapeDtypeStruct((B, rows_alloc, Np), out_dtype),
        grid_spec=pltpu.PrefetchScalarGridSpec(
            num_scalar_prefetch=0,
            grid=grid,
            in_specs=[
                pl.BlockSpec((None, tm, K), lambda b, i: (b, i, 0)),
                # Grid-invariant operands -> single buffered (saves VMEM).
                pl.BlockSpec((K, Np), lambda b, i: (0, 0),
                             pipeline_mode=pl.Buffered(1)),
                pl.BlockSpec((1, Np), lambda b, i: (0, 0),
                             pipeline_mode=pl.Buffered(1)),
            ],
            out_specs=pl.BlockSpec((None, tm, Np), lambda b, i: (b, i, 0)),
        ),
        compiler_params=pltpu.CompilerParams(
            dimension_semantics=("parallel", "parallel"),
            vmem_limit_bytes=vmem_limit,
            # Let XLA fuse the patchify producer into the patches operand if it
            # can (harmless hint otherwise).
            allow_input_fusion=[True, False, False],
        ),
        cost_estimate=pl.CostEstimate(
            flops=flops, transcendentals=0, bytes_accessed=bytes_accessed),
    )(patches, w_kn, bias_row)


# --------------------------------------------------------------------------- #
# Module wrapper
# --------------------------------------------------------------------------- #
class VideoMAEPatchEmbeddingsPallas:
    """JAX/Pallas re-implementation of transformers' VideoMAEPatchEmbeddings.

    Weights are held in float32 (matching the PyTorch module); the projection
    runs on the MXU in `compute_dtype` (bfloat16 by default on all TPU
    generations) with float32 accumulation + float32 bias add, and the
    embeddings are emitted in `out_dtype` (defaults to `compute_dtype`)."""

    def __init__(self, *, image_size, patch_size, num_channels, hidden_size,
                 num_frames, tubelet_size, key,
                 compute_dtype=jnp.bfloat16, out_dtype=None):
        image_size = (image_size, image_size) if isinstance(image_size, int) else tuple(image_size)
        patch_size = (patch_size, patch_size) if isinstance(patch_size, int) else tuple(patch_size)
        self.image_size = image_size
        self.patch_size = patch_size
        self.tubelet_size = int(tubelet_size)
        self.num_channels = num_channels
        self.hidden_size = hidden_size
        self.num_frames = num_frames
        self.compute_dtype = jnp.dtype(compute_dtype)
        self.out_dtype = jnp.dtype(out_dtype) if out_dtype is not None else self.compute_dtype
        self.num_patches = (
            (image_size[1] // patch_size[1])
            * (image_size[0] // patch_size[0])
            * (num_frames // self.tubelet_size))

        tt = self.tubelet_size
        ph, pw = patch_size
        K = num_channels * tt * ph * pw
        self._K = K

        # Conv3d(in=C, out=hidden, kernel=(tt, ph, pw), stride=(tt, ph, pw))
        kw_key, kb_key = jax.random.split(key)
        bound = float(K) ** -0.5
        self.weight = jax.random.uniform(
            kw_key, (hidden_size, num_channels, tt, ph, pw), jnp.float32, -bound, bound)
        self.bias = jax.random.uniform(kb_key, (hidden_size,), jnp.float32, -bound, bound)

        # Matmul operands, built ONCE.  Column flatten order (kt, c, kh, kw)
        # matches the patchify in __call__.  The hidden (lane) dim is padded to
        # a multiple of 128 for unmasked full-lane stores; padded columns carry
        # zero weight/bias and are sliced off after the kernel.
        w_kn = jnp.transpose(self.weight, (2, 1, 3, 4, 0)).reshape(K, hidden_size)
        Np = _round_up(hidden_size, 128)
        bias_row = self.bias
        if Np != hidden_size:
            w_kn = jnp.pad(w_kn, ((0, 0), (0, Np - hidden_size)))
            bias_row = jnp.pad(bias_row, (0, Np - hidden_size))
        self.w_kn = w_kn.astype(self.compute_dtype)
        self.bias_row = bias_row.reshape(1, Np).astype(jnp.float32)
        self._Np = Np

    def __call__(self, pixel_values, landmarks=None):
        B, T, C, H, W = pixel_values.shape
        if C != self.num_channels:
            raise ValueError("Make sure that the channel dimension of the pixel "
                             "values match with the one set in the configuration.")
        if H != self.image_size[0] or W != self.image_size[1]:
            raise ValueError(
                f"Input image size ({H}*{W}) doesn't match model "
                f"({self.image_size[0]}*{self.image_size[1]}).")

        tt = self.tubelet_size
        ph, pw = self.patch_size
        Tp, Hp, Wp = T // tt, H // ph, W // pw
        seq = Tp * Hp * Wp

        # Patchify straight from (B, T, C, H, W).  Cast to the narrow compute
        # dtype FIRST so the materialized transpose copy is half the HBM bytes.
        # Row order (T', H', W') matches Conv3d flatten(2).transpose(1, 2);
        # column order (kt, c, kh, kw) matches self.w_kn built in __init__.
        x = pixel_values.astype(self.compute_dtype)
        x = x.reshape(B, Tp, tt, C, Hp, ph, Wp, pw)
        x = jnp.transpose(x, (0, 1, 4, 6, 2, 3, 5, 7))   # (B,T',H',W',tt,C,ph,pw)
        patches = x.reshape(B, seq, self._K)
        # TODO(synk): for a fully HBM-optimal path, gather patches inside the
        # kernel (pixel_values left in HBM via memory_space=pl.ANY, per-slab DMA
        # + in-VMEM reshuffle) instead of materializing this transpose.

        L = 0 if landmarks is None else int(landmarks.shape[1])
        out = videomae_patch_projection(patches, self.w_kn, self.bias_row,
                                        out_dtype=self.out_dtype, extra_rows=L)

        rows_alloc, Np = out.shape[1], out.shape[2]
        if rows_alloc != seq + L or Np != self.hidden_size:
            out = out[:, :seq + L, :self.hidden_size]
        if landmarks is not None:
            # Write landmark tokens into the pre-allocated tail rows instead of
            # a concatenate that would re-stream the whole embeddings tensor.
            out = lax.dynamic_update_slice(
                out, landmarks.astype(out.dtype), (0, seq, 0))
        return out


# --------------------------------------------------------------------------- #
# Pure-JAX reference (mirrors PyTorch Conv3d exactly) and self-test
# --------------------------------------------------------------------------- #
def _reference_forward(module, pixel_values, landmarks):
    x = jnp.transpose(pixel_values, (0, 2, 1, 3, 4))  # (B, C, T, H, W)
    tt = module.tubelet_size
    ph, pw = module.patch_size
    y = lax.conv_general_dilated(
        x, module.weight,
        window_strides=(tt, ph, pw),
        padding="VALID",
        dimension_numbers=("NCDHW", "OIDHW", "NCDHW"),
    ) + module.bias.reshape(1, -1, 1, 1, 1)
    B, O = y.shape[0], y.shape[1]
    emb = jnp.transpose(y.reshape(B, O, -1), (0, 2, 1))  # (B, seq, hidden)
    if landmarks is not None:
        emb = jnp.concatenate([emb, landmarks], axis=1)
    return emb


if __name__ == "__main__":
    key = jax.random.PRNGKey(0)
    k_mod, k_px, k_lm = jax.random.split(key, 3)

    # Small config: B=2, T=4 frames, C=3, 16x16 images, 4x4 patches, tubelet=2,
    # hidden=32  ->  seq = (4//2) * (16//4) * (16//4) = 32, K = 2*3*4*4 = 96.
    B, T, C, H, W = 2, 4, 3, 16, 16
    hidden = 32
    pixel_values = jax.random.normal(k_px, (B, T, C, H, W), jnp.float32)
    landmarks = jax.random.normal(k_lm, (B, 4, hidden), jnp.float32)

    # Full-precision path (exact check vs lax Conv3d reference).
    mod_f32 = VideoMAEPatchEmbeddingsPallas(
        image_size=16, patch_size=4, num_channels=C, hidden_size=hidden,
        num_frames=T, tubelet_size=2, key=k_mod,
        compute_dtype=jnp.float32, out_dtype=jnp.float32)
    out_f32 = jax.block_until_ready(mod_f32(pixel_values, landmarks))
    ref = _reference_forward(mod_f32, pixel_values, landmarks)
    assert out_f32.shape == (B, mod_f32.num_patches + 4, hidden), out_f32.shape
    assert jnp.allclose(out_f32, ref, atol=1e-4, rtol=1e-4), "f32 mismatch vs conv reference"

    # Default path: bf16 compute + bf16 output, f32 accumulation (same weights).
    mod_bf16 = VideoMAEPatchEmbeddingsPallas(
        image_size=16, patch_size=4, num_channels=C, hidden_size=hidden,
        num_frames=T, tubelet_size=2, key=k_mod)
    out_bf16 = jax.block_until_ready(mod_bf16(pixel_values, landmarks))
    assert out_bf16.dtype == jnp.bfloat16
    assert out_bf16.shape == out_f32.shape
    assert jnp.allclose(out_bf16.astype(jnp.float32), ref, atol=5e-2, rtol=5e-2), \
        "bf16 mismatch vs conv reference"

    # landmarks=None branch.
    out_nol = jax.block_until_ready(mod_bf16(pixel_values, None))
    assert out_nol.shape == (B, mod_bf16.num_patches, hidden)

    print("KERNEL_OK")
</pallas_src>

<mosaic_0001>
module attributes {stable_mosaic.version = 11 : i64} {
  func.func @_projection_kernel(%arg0: i32, %arg1: i32, %arg2: memref<1x32x96xf32, #tpu.memory_space<vmem>>, %arg3: memref<96x128xf32, #tpu.memory_space<vmem>>, %arg4: memref<1x128xf32, #tpu.memory_space<vmem>>, %arg5: memref<1x32x128xf32, #tpu.memory_space<vmem>>) attributes {dimension_semantics = [#tpu.dimension_semantics<parallel>, #tpu.dimension_semantics<parallel>], iteration_bounds = array<i64: 2, 1>, scalar_prefetch = 0 : i64, scratch_operands = 0 : i64, tpu.core_type = #tpu.core_type<tc>, window_params = [{transform_indices = @transform_0, window_bounds = array<i64: 1, 32, 96>}, {pipeline_mode = #tpu.pipeline_mode<synchronous>, transform_indices = @transform_1, window_bounds = array<i64: 96, 128>}, {pipeline_mode = #tpu.pipeline_mode<synchronous>, transform_indices = @transform_2, window_bounds = array<i64: 1, 128>}, {transform_indices = @transform_3, window_bounds = array<i64: 1, 32, 128>}]} {
    %c0 = arith.constant 0 : index
    %c0_0 = arith.constant 0 : index
    %c0_1 = arith.constant 0 : index
    %0 = vector.load %arg2[%c0, %c0_0, %c0_1] : memref<1x32x96xf32, #tpu.memory_space<vmem>>, vector<1x32x96xf32>
    %1 = vector.shape_cast %0 : vector<1x32x96xf32> to vector<32x96xf32>
    %c0_2 = arith.constant 0 : index
    %c0_3 = arith.constant 0 : index
    %2 = vector.load %arg3[%c0_2, %c0_3] : memref<96x128xf32, #tpu.memory_space<vmem>>, vector<96x128xf32>
    %cst = arith.constant dense<0.000000e+00> : vector<32x128xf32>
    %3 = tpu.matmul %1, %2, %cst {dimension_numbers = #tpu.dot_dimension_numbers<[1], [0], [0], [1], [0, 0, 1, 1], [], []>} : vector<32x96xf32>, vector<96x128xf32>, vector<32x128xf32> -> vector<32x128xf32>
    %c0_4 = arith.constant 0 : index
    %c0_5 = arith.constant 0 : index
    %4 = vector.load %arg4[%c0_4, %c0_5] : memref<1x128xf32, #tpu.memory_space<vmem>>, vector<1x128xf32>
    %5 = vector.broadcast %4 : vector<1x128xf32> to vector<32x128xf32>
    %6 = arith.addf %3, %5 : vector<32x128xf32>
    %c0_6 = arith.constant 0 : index
    %c0_7 = arith.constant 0 : index
    %c0_8 = arith.constant 0 : index
    %7 = vector.load %arg5[%c0_6, %c0_7, %c0_8] : memref<1x32x128xf32, #tpu.memory_space<vmem>>, vector<1x32x128xf32>
    %8 = vector.shape_cast %7 : vector<1x32x128xf32> to vector<32x128xf32>
    %9 = vector.shape_cast %6 : vector<32x128xf32> to vector<1x32x128xf32>
    tpu.vector_store %arg5[%c0_6, %c0_7, %c0_8], %9 {strides = array<i32>} : memref<1x32x128xf32, #tpu.memory_space<vmem>>, vector<1x32x128xf32>,
    return
  }
  func.func @transform_0(%arg0: i32, %arg1: i32) -> (i32, i32, i32) {
    %c0_i32 = arith.constant 0 : i32
    %c0_i32_0 = arith.constant 0 : i32
    return %arg0, %arg1, %c0_i32 : i32, i32, i32
  }
  func.func @transform_1(%arg0: i32, %arg1: i32) -> (i32, i32) {
    %c0_i32 = arith.constant 0 : i32
    %c0_i32_0 = arith.constant 0 : i32
    %c0_i32_1 = arith.constant 0 : i32
    return %c0_i32, %c0_i32_0 : i32, i32
  }
  func.func @transform_2(%arg0: i32, %arg1: i32) -> (i32, i32) {
    %c0_i32 = arith.constant 0 : i32
    %c0_i32_0 = arith.constant 0 : i32
    %c0_i32_1 = arith.constant 0 : i32
    return %c0_i32, %c0_i32_0 : i32, i32
  }
  func.func @transform_3(%arg0: i32, %arg1: i32) -> (i32, i32, i32) {
    %c0_i32 = arith.constant 0 : i32
    %c0_i32_0 = arith.constant 0 : i32
    return %arg0, %arg1, %c0_i32 : i32, i32, i32
  }
}

</mosaic_0001>

<llo_original>
// kernel: tpu_custom_call.1
$region0: #{tpu_custom_call.1}
  #allocation0 [shape = 'u32[]', space=smem, size = 0x4, offset = 0x4, fixed_abs, tag = 'smem constant byte address 0x4 - core index']
  #allocation1 [shape = 'u32[72,128]{1,0:T(1,128)}', space=vmem, size = 0x9000, scoped, tag = 'internal scratch']
  %s0 = inlined_call_operand.hbm [shape: f32[2,32,96], index: 0, kind: input, shape index: {}]
  %s1 = inlined_call_operand.hbm [shape: f32[96,128], index: 1, kind: input, shape index: {}]
  %s2 = inlined_call_operand.vmem [shape: f32[1,128], index: 2, kind: input, shape index: {}]
  %s3 = inlined_call_operand.vmem [shape: f32[2,36,128], index: 3, kind: output, shape index: {}]
  %s4 = sld [smem:[#allocation0]]
  $region101: #{tpu_custom_call.1} parent=0
    _
  %s6 = ssub.s32 1, %s4
  %s7 = scalar_select 0, %s6, %s4
  $region1: #{tpu_custom_call.1} parent=0
    #allocation2 [shape = 'u8[32768]{0}', space=vmem, size = 0x8000, scoped, tag = 'input window, operand 0']
    #allocation3 [shape = 's32[2]{0}', space=sflag, size = 0x8, scoped, tag = 'scoped memory for tpu_custom_call.1']
    #allocation4 [shape = 'u8[49152]{0}', space=vmem, size = 0xc000, scoped, tag = 'input window, operand 1, single buffered']
    #allocation5 [shape = 's32[1]{0}', space=sflag, size = 0x4, scoped, tag = 'scoped memory for tpu_custom_call.1']
    #allocation6 [shape = 'u8[32768]{0}', space=vmem, size = 0x8000, scoped, tag = 'output window, operand 0']
    %8 = vsyncpa [#allocation3], 0
    %s9 = scalar_lea.sflag [#allocation3], 1
    %10 = vsyncpa %s9, 0
    %11 = vsyncpa [#allocation5], 0
    loop: start=0, step=1, limit=4
    $region2: #{tpu_custom_call.1} parent=1 // loop_pre_header
      _
    $region3: #{tpu_custom_call.1} parent=1 // loop_header
      %s13 = sphi 0, %s17
      %p14 = scmp.ge.s32.totalorder %s13, 4
      %s20 = sphi 0, %s32
      %s21 = sphi 0, %s28
      %s22 = sphi 0, %s20
      %s23 = sphi 0, %s21
      %s24 = sphi 0, %s22
      %s25 = sphi 0, %s23
      %s37 = sphi 0, %s39
      %s40 = sphi 0, %s37
      %s41 = sphi 0, %s40
      %s57 = sphi 0, %s41
      %s61 = sphi 0, %s61
      %s63 = sphi 0, %s61
      %s64 = sphi 0, %s63
      %s78 = sphi 0, %s64
      %s82 = sphi 0, %s82
      %s84 = sphi 0, %s82
      %s85 = sphi 0, %s84
      %s99 = sphi 0, %s85
      %s107 = sphi 0, %s109
      %s110 = sphi 0, %s107
      %s111 = sphi 0, %s110
      %s127 = sphi 0, %s111
    $region4: #{tpu_custom_call.1} parent=1 // loop_header_branch
      %16 = sbr.rel (%p14) target = $region8
    $region5: #{tpu_custom_call.1} parent=1 // loop_body
      %s18 = ssub.s32 %s13, 1
      %s19 = ssub.s32 %s13, 2
      %s26 = sadd.s32 1, %s21
      %p27 = scmp.ge.s32.totalorder %s26, 1
      %s28 = scalar_select %p27, 0, %s26
      %s29 = sadd.s32 1, %s20
      %s30 = scalar_select %p27, %s29, %s20
      %p31 = scmp.ge.s32.totalorder %s30, 2
      %s32 = scalar_select %p31, 0, %s30
      %s33 = ssub.s32 %s20, %s32
      %s34 = ssub.s32 %s21, %s28
      %s35 = sor.u32 %s33, %s34
      %p36 = scmp.eq.s32.totalorder %s35, 0
      %s38 = sadd.s32 %s37, 1
      %s39 = scalar_select %p36, %s37, %s38
      %p42 = pneg %p36
      %p43 = scmp.eq.s32.totalorder %s13, 1
      %p44 = por %p42, %p43
      %p45 = scmp.ne.s32.totalorder %s37, %s40
      %p46 = scmp.eq.s32.totalorder %s13, 0
      %p47 = por %p45, %p46
      %p48 = scmp.ne.s32.totalorder %s37, %s40
      %p49 = scmp.eq.s32.totalorder %s18, 1
      %p50 = por %p48, %p49
      %p51 = scmp.ne.s32.totalorder %s40, %s41
      %p52 = scmp.eq.s32.totalorder %s18, 0
      %p53 = por %p51, %p52
      %p54 = scmp.ne.s32.totalorder %s40, %s41
      %p55 = scmp.eq.s32.totalorder %s19, 1
      %p56 = por %p54, %p55
      %p58 = scmp.ne.s32.totalorder %s41, %s57
      %p59 = scmp.eq.s32.totalorder %s19, 0
      %p60 = por %p58, %p59
      %s62 = sadd.s32 %s61, 1
      %p65 = scmp.eq.s32.totalorder %s13, 1
      %p66 = scmp.ne.s32.totalorder %s61, %s63
      %p67 = scmp.eq.s32.totalorder %s13, 0
      %p68 = por %p66, %p67
      %p69 = scmp.ne.s32.totalorder %s61, %s63
      %p70 = scmp.eq.s32.totalorder %s18, 1
      %p71 = por %p69, %p70
      %p72 = scmp.ne.s32.totalorder %s63, %s64
      %p73 = scmp.eq.s32.totalorder %s18, 0
      %p74 = por %p72, %p73
      %p75 = scmp.ne.s32.totalorder %s63, %s64
      %p76 = scmp.eq.s32.totalorder %s19, 1
      %p77 = por %p75, %p76
      %p79 = scmp.ne.s32.totalorder %s64, %s78
      %p80 = scmp.eq.s32.totalorder %s19, 0
      %p81 = por %p79, %p80
      %s83 = sadd.s32 %s82, 1
      %p86 = scmp.eq.s32.totalorder %s13, 1
      %p87 = scmp.ne.s32.totalorder %s82, %s84
      %p88 = scmp.eq.s32.totalorder %s13, 0
      %p89 = por %p87, %p88
      %p90 = scmp.ne.s32.totalorder %s82, %s84
      %p91 = scmp.eq.s32.totalorder %s18, 1
      %p92 = por %p90, %p91
      %p93 = scmp.ne.s32.totalorder %s84, %s85
      %p94 = scmp.eq.s32.totalorder %s18, 0
      %p95 = por %p93, %p94
      %p96 = scmp.ne.s32.totalorder %s84, %s85
      %p97 = scmp.eq.s32.totalorder %s19, 1
      %p98 = por %p96, %p97
      %p100 = scmp.ne.s32.totalorder %s85, %s99
      %p101 = scmp.eq.s32.totalorder %s19, 0
      %p102 = por %p100, %p101
      %s103 = ssub.s32 %s20, %s32
      %s104 = ssub.s32 %s21, %s28
      %s105 = sor.u32 %s103, %s104
      %p106 = scmp.eq.s32.totalorder %s105, 0
      %s108 = sadd.s32 %s107, 1
      %s109 = scalar_select %p106, %s107, %s108
      %p112 = pneg %p106
      %p113 = scmp.eq.s32.totalorder %s13, 1
      %p114 = por %p112, %p113
      %p115 = scmp.ne.s32.totalorder %s107, %s110
      %p116 = scmp.eq.s32.totalorder %s13, 0
      %p117 = por %p115, %p116
      %p118 = scmp.ne.s32.totalorder %s107, %s110
      %p119 = scmp.eq.s32.totalorder %s18, 1
      %p120 = por %p118, %p119
      %p121 = scmp.ne.s32.totalorder %s110, %s111
      %p122 = scmp.eq.s32.totalorder %s18, 0
      %p123 = por %p121, %p122
      %p124 = scmp.ne.s32.totalorder %s110, %s111
      %p125 = scmp.eq.s32.totalorder %s19, 1
      %p126 = por %p124, %p125
      %p128 = scmp.ne.s32.totalorder %s111, %s127
      %p129 = scmp.eq.s32.totalorder %s19, 0
      %p130 = por %p128, %p129
      %p131 = scmp.le.s32.totalorder 1, %s13
      %p132 = scmp.lt.s32.totalorder %s13, 3
      %p133 = pnand %p131, %p132
      %p134 = pneg %p133
      // Predicated region
      $region9: #{tpu_custom_call.1} parent=5 // pred_check
        _
      $region10: #{tpu_custom_call.1} parent=5 // pred_check_branch
        %136 = sbr.rel (%p133) target = $region12
      $region11: #{tpu_custom_call.1} parent=5 // pred_region
        %s137 = ssub.s32 %s13, 1
        // Predicated region
        $region13: #{tpu_custom_call.1} parent=11 // pred_check
          %p138 = pneg %p74
        $region14: #{tpu_custom_call.1} parent=11 // pred_check_branch
          %140 = sbr.rel (%p138) target = $region16
        $region15: #{tpu_custom_call.1} parent=11 // pred_region
          %142 = vsyncadd [#allocation5], 0
          %s143 = sshll.u32 %s1, 4
          %s144 = int_to_ptr.hbm [resolvable:$true] %s143
          %s145 = sshll.u32 [#allocation4], 4
          %s146 = int_to_ptr.vmem [resolvable:$true] %s145
          %151 = dma.hbm_to_vmem [thread:$0]  %s144, 1536, %s146, [#allocation5], 128, 128, 8
        $region16: #{tpu_custom_call.1} parent=11 // pred_fallthru
          _
        // Predicated region
        $region17: #{tpu_custom_call.1} parent=11 // pred_check
          %p152 = pneg %p95
        $region18: #{tpu_custom_call.1} parent=11 // pred_check_branch
          %154 = sbr.rel (%p152) target = $region20
        $region19: #{tpu_custom_call.1} parent=11 // pred_region
          _
        $region20: #{tpu_custom_call.1} parent=11 // pred_fallthru
          _
      $region12: #{tpu_custom_call.1} parent=5 // pred_fallthru
        _
      %p155 = scmp.lt.s32.totalorder %s13, 2
      // Predicated region
      $region21: #{tpu_custom_call.1} parent=5 // pred_check
        %p156 = pneg %p155
      $region22: #{tpu_custom_call.1} parent=5 // pred_check_branch
        %158 = sbr.rel (%p156) target = $region24
      $region23: #{tpu_custom_call.1} parent=5 // pred_region
        // Predicated region
        $region25: #{tpu_custom_call.1} parent=23 // pred_check
          %p159 = pneg %p47
        $region26: #{tpu_custom_call.1} parent=23 // pred_check_branch
          %161 = sbr.rel (%p159) target = $region28
        $region27: #{tpu_custom_call.1} parent=23 // pred_region
          %s162 = sand.u32 %s37, 1
          %s163 = scalar_lea.sflag [#allocation3], %s162
          %s164 = sand.u32 %s37, 1
          %s165 = smul.addr %s164, 32
          %s166 = scalar_lea.vmem [#allocation2], %s165
          %s167 = smul.u32 4, %s21
          %169 = vsyncadd %s163, 0
          %s170 = smul.addr %s20, 4
          %s171 = sadd.s32 %s167, %s170
          %s172 = smul.addr %s171, 8
          %s173 = scalar_lea.hbm %s0, %s172
          %s174 = sshll.u32 %s173, 4
          %s175 = int_to_ptr.hbm [resolvable:$true] %s174
          %s176 = sshll.u32 %s166, 4
          %s177 = int_to_ptr.vmem [resolvable:$true] %s176
          %182 = dma.hbm_to_vmem [thread:$0]  %s175, 512, %s177, %s163, 128, 128, 8
        $region28: #{tpu_custom_call.1} parent=23 // pred_fallthru
          _
      $region24: #{tpu_custom_call.1} parent=5 // pred_fallthru
        _
      %p183 = scmp.le.s32.totalorder 1, %s13
      %p184 = scmp.lt.s32.totalorder %s13, 3
      %p185 = pnand %p183, %p184
      %p186 = pneg %p185
      // Predicated region
      $region29: #{tpu_custom_call.1} parent=5 // pred_check
        _
      $region30: #{tpu_custom_call.1} parent=5 // pred_check_branch
        %188 = sbr.rel (%p185) target = $region32
      $region31: #{tpu_custom_call.1} parent=5 // pred_region
        %s189 = ssub.s32 %s13, 1
        %s190 = sand.u32 %s40, 1
        %s191 = scalar_lea.sflag [#allocation3], %s190
        %s192 = sand.u32 %s40, 1
        %s193 = smul.addr %s192, 32
        %s194 = scalar_lea.vmem [#allocation2], %s193
        // Predicated region
        $region33: #{tpu_custom_call.1} parent=31 // pred_check
          %p195 = pneg %p53
        $region34: #{tpu_custom_call.1} parent=31 // pred_check_branch
          %197 = sbr.rel (%p195) target = $region36
        $region35: #{tpu_custom_call.1} parent=31 // pred_region
          %199 = dma.done %s191, 512
        $region36: #{tpu_custom_call.1} parent=31 // pred_fallthru
          _
        // Predicated region
        $region37: #{tpu_custom_call.1} parent=31 // pred_check
          %p200 = pneg %p74
        $region38: #{tpu_custom_call.1} parent=31 // pred_check_branch
          %202 = sbr.rel (%p200) target = $region40
        $region39: #{tpu_custom_call.1} parent=31 // pred_region
          %204 = dma.done [#allocation5], 1536
        $region40: #{tpu_custom_call.1} parent=31 // pred_fallthru
          _
        %s205 = sand.u32 %s40, 1
        %s206 = scalar_lea.sflag [#allocation3], %s205
        %s207 = sand.u32 %s40, 1
        %s208 = smul.addr %s207, 32
        %s209 = scalar_lea.vmem [#allocation2], %s208
        %p210 = pneg %p53
        %p211 = pneg %p50
        %p212 = pneg %p74
        %p213 = pneg %p71
        %p214 = pneg %p95
        %p215 = pneg %p92
        %p216 = pneg %p123
        %p217 = pneg %p120
        %s218 = sand.u32 %s110, 1
        %s219 = sand.u32 %s110, 1
        %s220 = smul.addr %s219, 32
        %s221 = scalar_lea.vmem [#allocation6], %s220
        %s222 = smul.u32 4, %s23
        %s223 = smul.u32 4, %s23
        %s224 = ssub.s32 5, %s223
        %p225 = scmp.lt.s32.totalorder %s224, 4
        %s226 = scalar_select %p225, %s224, 4
        %s227 = smul.u32 8, %s226
        %v228 = vld [vmem:[%s194] sm:$0xff]
        %v229 = vld [vmem:[%s194 + $0x8] sm:$0xff]
        %v230 = vld [vmem:[%s194 + $0x10] sm:$0xff]
        %v231 = vld [vmem:[%s194 + $0x18] sm:$0xff]
        %v232 = vld [vmem:[#allocation4] sm:$0xff]
        %v233 = vld [vmem:[#allocation4 + $0x8] sm:$0xff]
        %v234 = vld [vmem:[#allocation4 + $0x10] sm:$0xff]
        %v235 = vld [vmem:[#allocation4 + $0x18] sm:$0xff]
        %v236 = vld [vmem:[#allocation4 + $0x20] sm:$0xff]
        %v237 = vld [vmem:[#allocation4 + $0x28] sm:$0xff]
        %v238 = vld [vmem:[#allocation4 + $0x30] sm:$0xff]
        %v239 = vld [vmem:[#allocation4 + $0x38] sm:$0xff]
        %v240 = vld [vmem:[#allocation4 + $0x40] sm:$0xff]
        %v241 = vld [vmem:[#allocation4 + $0x48] sm:$0xff]
        %v242 = vld [vmem:[#allocation4 + $0x50] sm:$0xff]
        %v243 = vld [vmem:[#allocation4 + $0x58] sm:$0xff]
        %v244 = vld [vmem:[%s2] sm:$0x1]
        %v246 = vperm.slane %v244, 0
        %vm248 = vcmask 785408
        %v250 = vsel %vm248, %v228, 0
        %v253 = vsel %vm248, %v229, 0
        %v256 = vsel %vm248, %v230, 0
        %v259 = vsel %vm248, %v231, 0
        %261 = vmatpush.msra.mxu0 0.0
        %262 = vmatpush.msra.mxu0 0.0
        %263 = vmatpush.msra.mxu0 0.0
        %264 = vmatpush.msra.mxu0 0.0
        %265 = vmatpush.msra.mxu0 %v243
        %266 = vmatpush.msra.mxu0 %v242
        %267 = vmatpush.msra.mxu0 %v241
        %268 = vmatpush.msra.mxu0 %v240
        %269 = vmatpush.msra.mxu0 %v239
        %270 = vmatpush.msra.mxu0 %v238
        %271 = vmatpush.msra.mxu0 %v237
        %272 = vmatpush.msra.mxu0 %v236
        %273 = vmatpush.msra.mxu0 %v235
        %274 = vmatpush.msra.mxu0 %v234
        %275 = vmatpush.msra.mxu0 %v233
        %276 = vmatpush.msra.mxu0 %v232
        %277 = vmatmul.f32.gmra.mxu0 %v250
        %v278 = vpop.f32.mrf.mxu0
        %v279 = vadd.f32 %v246, %v278
        %280 = vmatmul.f32.gmra.mxu0 %v253
        %v281 = vpop.f32.mrf.mxu0
        %v282 = vadd.f32 %v246, %v281
        %283 = vmatmul.f32.gmra.mxu0 %v256
        %v284 = vpop.f32.mrf.mxu0
        %v285 = vadd.f32 %v246, %v284
        %286 = vmatmul.f32.gmra.mxu0 %v259
        %v287 = vpop.f32.mrf.mxu0
        %v288 = vadd.f32 %v246, %v287
        %289 = vdwg.mxu0
        %290 = vst [vmem:[%s221] sm:$0xff] %v279
        %291 = vst [vmem:[%s221 + $0x8] sm:$0xff] %v282
        %292 = vst [vmem:[%s221 + $0x10] sm:$0xff] %v285
        %293 = vst [vmem:[%s221 + $0x18] sm:$0xff] %v288
        %s294 = sand.u32 %s110, 1
        %s295 = sand.u32 %s110, 1
        %s296 = smul.addr %s295, 32
        %s297 = scalar_lea.vmem [#allocation6], %s296
        // Predicated region
        $region41: #{tpu_custom_call.1} parent=31 // pred_check
          %p298 = pneg %p120
        $region42: #{tpu_custom_call.1} parent=31 // pred_check_branch
          %300 = sbr.rel (%p298) target = $region44
        $region43: #{tpu_custom_call.1} parent=31 // pred_region
          %s301 = smul.u32 4, %s23
          %s302 = ssub.s32 5, %s301
          %p303 = scmp.lt.s32.totalorder %s302, 4
          %s304 = scalar_select %p303, %s302, 4
          %s305 = smul.u32 8, %s304
          %p306 = scmp.ne.s32.totalorder 0, %s305
          %s307 = smul.addr %s22, 5
          %s308 = sadd.s32 %s301, %s307
          %s309 = smul.addr %s308, 8
          %s310 = scalar_lea.vmem %s3, %s309
          // Predicated region
          $region45: #{tpu_custom_call.1} parent=43 // pred_check
            %p311 = pneg %p306
          $region46: #{tpu_custom_call.1} parent=43 // pred_check_branch
            %313 = sbr.rel (%p311) target = $region48
          $region47: #{tpu_custom_call.1} parent=43 // pred_region
            // Predicated region
            $region49: #{tpu_custom_call.1} parent=47 // pred_check
              _
            $region50: #{tpu_custom_call.1} parent=47 // pred_check_branch
              %315 = sbr.rel (0) target = $region52
            $region51: #{tpu_custom_call.1} parent=47 // pred_region
              // Predicated region
              $region71: #{tpu_custom_call.1} parent=51 // pred_check
                _
              $region72: #{tpu_custom_call.1} parent=51 // pred_check_branch
                %371 = sbr.rel (0) target = $region74
              $region73: #{tpu_custom_call.1} parent=51 // pred_region
                %s372 = sshrl.u32 %s304, 2
                // While loop
                $region75: #{tpu_custom_call.1} parent=73 // loop_pre_header
                  _
                $region76: #{tpu_custom_call.1} parent=73 // loop_header
                  %s374 = sphi 0, %s376
                  %p375 = scmp.ge.s32.totalorder %s374, %s372
                  %s379 = sphi 0, %s392
                  %s380 = sphi %s297, %s395
                  %s381 = sphi %s310, %s396
                $region77: #{tpu_custom_call.1} parent=73 // loop_header_branch
                  %378 = sbr.rel (%p375) target = $region81
                $region78: #{tpu_custom_call.1} parent=73 // loop_body
                  %v382 = vld [vmem:[%s380] sm:$0xff]
                  %383 = vst [vmem:[%s381] sm:$0xff] %v382
                  %v384 = vld [vmem:[%s380 + $0x8] sm:$0xff]
                  %385 = vst [vmem:[%s381 + $0x8] sm:$0xff] %v384
                  %v386 = vld [vmem:[%s380 + $0x10] sm:$0xff]
                  %387 = vst [vmem:[%s381 + $0x10] sm:$0xff] %v386
                  %v388 = vld [vmem:[%s380 + $0x18] sm:$0xff]
                  %389 = vst [vmem:[%s381 + $0x18] sm:$0xff] %v388
                  %s390 = sadd.s32 1, %s379
                  %p391 = scmp.ge.s32.totalorder %s390, %s372
                  %s392 = scalar_select %p391, 0, %s390
                  %s393 = smul.u32 %s392, 32
                  %s394 = smul.u32 %s392, 32
                  %s395 = scalar_lea.vmem %s297, %s393 [#allocation6]
                  %s396 = scalar_lea.vmem %s310, %s394
                $region79: #{tpu_custom_call.1} parent=73 // loop_footer
                  %s376 = sadd.s32 %s374, 1
                $region80: #{tpu_custom_call.1} parent=73 // loop_footer_branch
                  %373 = sbr.rel target = $region76
                $region81: #{tpu_custom_call.1} parent=73 // loop_exit
                  _
                %s397 = sshrl.u32 %s304, 2
                %s398 = sand.u32 %s304, 3
                %s399 = smul.u32 %s397, 4
                %s400 = smul.u32 8, %s399
                %s401 = scalar_lea.vmem %s297, %s400 [#allocation6]
                %s402 = smul.u32 8, %s399
                %s403 = scalar_lea.vmem %s310, %s402
                // While loop
                $region82: #{tpu_custom_call.1} parent=73 // loop_pre_header
                  _
                $region83: #{tpu_custom_call.1} parent=73 // loop_header
                  %s405 = sphi 0, %s407
                  %p406 = scmp.ge.s32.totalorder %s405, %s398
                  %s410 = sphi 0, %s417
                  %s411 = sphi %s401, %s420
                  %s412 = sphi %s403, %s421
                $region84: #{tpu_custom_call.1} parent=73 // loop_header_branch
                  %409 = sbr.rel (%p406) target = $region88
                $region85: #{tpu_custom_call.1} parent=73 // loop_body
                  %v413 = vld [vmem:[%s411] sm:$0xff]
                  %414 = vst [vmem:[%s412] sm:$0xff] %v413
                  %s415 = sadd.s32 1, %s410
                  %p416 = scmp.ge.s32.totalorder %s415, %s398
                  %s417 = scalar_select %p416, 0, %s415
                  %s418 = smul.u32 %s417, 8
                  %s419 = smul.u32 %s417, 8
                  %s420 = scalar_lea.vmem %s401, %s418 [#allocation6]
                  %s421 = scalar_lea.vmem %s403, %s419
                $region86: #{tpu_custom_call.1} parent=73 // loop_footer
                  %s407 = sadd.s32 %s405, 1
                $region87: #{tpu_custom_call.1} parent=73 // loop_footer_branch
                  %404 = sbr.rel target = $region83
                $region88: #{tpu_custom_call.1} parent=73 // loop_exit
                  _
              $region74: #{tpu_custom_call.1} parent=51 // pred_fallthru
                _
              // Predicated region
              $region89: #{tpu_custom_call.1} parent=51 // pred_check
                _
              $region90: #{tpu_custom_call.1} parent=51 // pred_check_branch
                %423 = sbr.rel target = $region92
              $region91: #{tpu_custom_call.1} parent=51 // pred_region
                _
              $region92: #{tpu_custom_call.1} parent=51 // pred_fallthru
                _
            $region52: #{tpu_custom_call.1} parent=47 // pred_fallthru
              _
            // Predicated region
            $region53: #{tpu_custom_call.1} parent=47 // pred_check
              _
            $region54: #{tpu_custom_call.1} parent=47 // pred_check_branch
              %317 = sbr.rel target = $region56
            $region55: #{tpu_custom_call.1} parent=47 // pred_region
              %s319 = ssub.s32 256, 1
              %s320 = sshrl.u32 %s304, 2
              // While loop
              $region57: #{tpu_custom_call.1} parent=55 // loop_pre_header
                _
              $region58: #{tpu_custom_call.1} parent=55 // loop_header
                %s322 = sphi 0, %s324
                %p323 = scmp.ge.s32.totalorder %s322, %s320
                %s327 = sphi 0, %s340
                %s328 = sphi %s297, %s343
                %s329 = sphi %s310, %s344
              $region59: #{tpu_custom_call.1} parent=55 // loop_header_branch
                %326 = sbr.rel (%p323) target = $region63
              $region60: #{tpu_custom_call.1} parent=55 // loop_body
                %v330 = vld [vmem:[%s328] sm:%s319]
                %331 = vst [vmem:[%s329] sm:%s319] %v330
                %v332 = vld [vmem:[%s328 + $0x8] sm:%s319]
                %333 = vst [vmem:[%s329 + $0x8] sm:%s319] %v332
                %v334 = vld [vmem:[%s328 + $0x10] sm:%s319]
                %335 = vst [vmem:[%s329 + $0x10] sm:%s319] %v334
                %v336 = vld [vmem:[%s328 + $0x18] sm:%s319]
                %337 = vst [vmem:[%s329 + $0x18] sm:%s319] %v336
                %s338 = sadd.s32 1, %s327
                %p339 = scmp.ge.s32.totalorder %s338, %s320
                %s340 = scalar_select %p339, 0, %s338
                %s341 = smul.u32 %s340, 32
                %s342 = smul.u32 %s340, 32
                %s343 = scalar_lea.vmem %s297, %s341 [#allocation6]
                %s344 = scalar_lea.vmem %s310, %s342
              $region61: #{tpu_custom_call.1} parent=55 // loop_footer
                %s324 = sadd.s32 %s322, 1
              $region62: #{tpu_custom_call.1} parent=55 // loop_footer_branch
                %321 = sbr.rel target = $region58
              $region63: #{tpu_custom_call.1} parent=55 // loop_exit
                _
              %s345 = sshrl.u32 %s304, 2
              %s346 = sand.u32 %s304, 3
              %s347 = smul.u32 %s345, 4
              %s348 = smul.u32 8, %s347
              %s349 = scalar_lea.vmem %s297, %s348 [#allocation6]
              %s350 = smul.u32 8, %s347
              %s351 = scalar_lea.vmem %s310, %s350
              // While loop
              $region64: #{tpu_custom_call.1} parent=55 // loop_pre_header
                _
              $region65: #{tpu_custom_call.1} parent=55 // loop_header
                %s353 = sphi 0, %s355
                %p354 = scmp.ge.s32.totalorder %s353, %s346
                %s358 = sphi 0, %s365
                %s359 = sphi %s349, %s368
                %s360 = sphi %s351, %s369
              $region66: #{tpu_custom_call.1} parent=55 // loop_header_branch
                %357 = sbr.rel (%p354) target = $region70
              $region67: #{tpu_custom_call.1} parent=55 // loop_body
                %v361 = vld [vmem:[%s359] sm:%s319]
                %362 = vst [vmem:[%s360] sm:%s319] %v361
                %s363 = sadd.s32 1, %s358
                %p364 = scmp.ge.s32.totalorder %s363, %s346
                %s365 = scalar_select %p364, 0, %s363
                %s366 = smul.u32 %s365, 8
                %s367 = smul.u32 %s365, 8
                %s368 = scalar_lea.vmem %s349, %s366 [#allocation6]
                %s369 = scalar_lea.vmem %s351, %s367
              $region68: #{tpu_custom_call.1} parent=55 // loop_footer
                %s355 = sadd.s32 %s353, 1
              $region69: #{tpu_custom_call.1} parent=55 // loop_footer_branch
                %352 = sbr.rel target = $region65
              $region70: #{tpu_custom_call.1} parent=55 // loop_exit
                _
            $region56: #{tpu_custom_call.1} parent=47 // pred_fallthru
              _
          $region48: #{tpu_custom_call.1} parent=43 // pred_fallthru
            _
          %424 = vnop
        $region44: #{tpu_custom_call.1} parent=31 // pred_fallthru
          _
      $region32: #{tpu_custom_call.1} parent=5 // pred_fallthru
        _
      %p425 = scmp.le.s32.totalorder 2, %s13
      // Predicated region
      $region93: #{tpu_custom_call.1} parent=5 // pred_check
        %p426 = pneg %p425
      $region94: #{tpu_custom_call.1} parent=5 // pred_check_branch
        %428 = sbr.rel (%p426) target = $region96
      $region95: #{tpu_custom_call.1} parent=5 // pred_region
        %s429 = ssub.s32 %s13, 2
        // Predicated region
        $region97: #{tpu_custom_call.1} parent=95 // pred_check
          %p430 = pneg %p126
        $region98: #{tpu_custom_call.1} parent=95 // pred_check_branch
          %432 = sbr.rel (%p430) target = $region100
        $region99: #{tpu_custom_call.1} parent=95 // pred_region
          %s433 = sand.u32 %s111, 1
          %s434 = sand.u32 %s111, 1
          %s435 = smul.addr %s434, 32
          %s436 = scalar_lea.vmem [#allocation6], %s435
        $region100: #{tpu_custom_call.1} parent=95 // pred_fallthru
          _
      $region96: #{tpu_custom_call.1} parent=5 // pred_fallthru
        _
    $region6: #{tpu_custom_call.1} parent=1 // loop_footer
      %s17 = sadd.s32 1, %s13
    $region7: #{tpu_custom_call.1} parent=1 // loop_footer_branch
      %12 = sbr.rel target = $region3
    $region8: #{tpu_custom_call.1} parent=1 // loop_exit
      _
    %437 = vsyncpa [#allocation3], 1
    %s438 = scalar_lea.sflag [#allocation3], 1
    %439 = vsyncpa %s438, 1
    %440 = vsyncpa [#allocation5], 1

</llo_original>
